<compile_context>
chip_gen: v6e
topology: v6e:2x2x1
jax: 0.10.0
libtpu: 0.0.40
codegen_flags: <defaults>
</compile_context>

<pallas_src>
import functools
import math

import jax
import jax.numpy as jnp
from jax.experimental import pallas as pl
from jax.experimental.pallas import tpu as pltpu


def _factor_proj_kernel(x_ref, w_ref, b_ref, o_ref, *, wscale, relu_slope, eps):
    # x_ref: (1, K, t)   w_ref: (O, K)   b_ref: (O, 1)   o_ref: (1, O, t)
    x = x_ref[0]                                      # (K, t) pixels on lanes
    w = w_ref[...] * wscale                           # he-scale folded in-kernel (tiny)
    # 1x1 "conv": per-pixel matmul on the MXU, f32 accumulation.
    y = jnp.dot(w, x, preferred_element_type=jnp.float32)   # (O, t)
    y = y + b_ref[...]                                # bias broadcast over pixels
    # LeakyReLU(relu_slope)
    y = jnp.where(y >= 0, y, relu_slope * y)
    # PixelNorm over the channel (sublane) axis.
    inv = jax.lax.rsqrt(jnp.mean(y * y, axis=0, keepdims=True) + eps)
    o_ref[0] = (y * inv).astype(o_ref.dtype)


def _pick_pixel_tile(hw, n_images, cap=2048):
    """Largest lane-dense pixel tile that divides H*W exactly (no padding)."""
    if hw <= cap:
        t = hw
        # Keep >= 2 total grid iterations when possible (megacore / pipelining).
        if n_images * (hw // t) < 2 and hw % 256 == 0:
            t = hw // 2
        return t
    t = cap - cap % 128
    while t >= 128:
        if hw % t == 0:
            return t
        t -= 128
    return hw   # fallback: one full pixel row per block (still no padding)


@functools.partial(jax.jit, static_argnames=("relu_slope", "eps", "pixel_tile"))
def factor_projection_3d2d(x, weight, bias, *, relu_slope=0.2, eps=1e-8,
                           pixel_tile=None):
    """x: (N, C, D, H, W) f32.  weight: (O, C*D) raw (unscaled).  bias: (O,).

    Returns (N, O, H, W) f32 (NCHW, matching the PyTorch module).
    """
    N, C, D, H, W = x.shape
    K = C * D
    O = weight.shape[0]
    HW = H * W

    wscale = math.sqrt(2.0 / K)        # EqualizedConv2d he-scale, fan_in = K*1*1

    # Native layout: pure metadata reshapes, no HBM copies (under jit).
    x_3d = x.reshape(N, K, HW)
    b_2d = bias.reshape(O, 1)

    t_hw = pixel_tile if pixel_tile is not None else _pick_pixel_tile(HW, N)
    assert HW % t_hw == 0, "pixel tile must divide H*W"
    grid = (N, HW // t_hw)

    # Explicit VMEM budgeting: double-buffered x + out tiles plus weights/bias.
    # Only override the scoped default if K/O grow large (keeps v7x's 64 MiB
    # physical / 32 MiB scoped default safe as channel counts scale).
    est_vmem = 2 * 4 * t_hw * (K + O) + 4 * (O * K + O)
    vmem_limit = None
    if est_vmem > 24 * (1 << 20):
        vmem_limit = min(2 * est_vmem, 60 * (1 << 20))

    kernel = functools.partial(_factor_proj_kernel, wscale=wscale,
                               relu_slope=relu_slope, eps=eps)

    out = pl.pallas_call(
        kernel,
        out_shape=jax.ShapeDtypeStruct((N, O, HW), jnp.float32),
        grid_spec=pltpu.PrefetchScalarGridSpec(
            num_scalar_prefetch=0,
            grid=grid,
            in_specs=[
                pl.BlockSpec((1, K, t_hw), lambda n, p: (n, 0, p)),  # pixels
                pl.BlockSpec((O, K), lambda n, p: (0, 0)),           # raw weight
                pl.BlockSpec((O, 1), lambda n, p: (0, 0)),           # bias
            ],
            out_specs=pl.BlockSpec((1, O, t_hw), lambda n, p: (n, 0, p)),
        ),
        compiler_params=pltpu.CompilerParams(
            dimension_semantics=("parallel", "parallel"),
            vmem_limit_bytes=vmem_limit),
    )(x_3d, weight, b_2d)

    # (N, O, H*W) is already NCHW order -> pure reshape, no transpose.
    return out.reshape(N, O, H, W)


def _reference(x, weight, bias, relu_slope=0.2, eps=1e-8):
    N, C, D, H, W = x.shape
    K = C * D
    wscale = jnp.sqrt(2.0 / K)
    x2 = x.reshape(N, K, H, W)
    y = jnp.einsum("nkhw,ok->nohw", x2, weight * wscale) + bias[None, :, None, None]
    y = jnp.where(y >= 0, y, relu_slope * y)
    return y / jnp.sqrt(jnp.mean(y * y, axis=1, keepdims=True) + eps)


if __name__ == "__main__":
    # Module config: in_channels=4, out_size=8 (depth D), out_channels=32.
    N, C, D, H, W = 2, 4, 8, 16, 16
    O = 32
    K = C * D

    key = jax.random.PRNGKey(0)
    kx, kw, kb = jax.random.split(key, 3)
    x = jax.random.normal(kx, (N, C, D, H, W), dtype=jnp.float32)
    # EqualizedConv2d init: raw weight ~ N(0,1) (he-scaled at runtime).
    weight = jax.random.normal(kw, (O, K), dtype=jnp.float32)
    bias = 0.1 * jax.random.normal(kb, (O,), dtype=jnp.float32)

    out = factor_projection_3d2d(x, weight, bias)
    out = jax.block_until_ready(out)

    ref = _reference(x, weight, bias)
    assert out.shape == (N, O, H, W)
    assert jnp.allclose(out, ref, atol=1e-4, rtol=1e-4), "mismatch vs reference"

    print("KERNEL_OK")
</pallas_src>

<mosaic_0001>
module attributes {stable_mosaic.version = 11 : i64} {
  func.func @_factor_proj_kernel(%arg0: i32, %arg1: i32, %arg2: memref<1x32x256xf32, #tpu.memory_space<vmem>>, %arg3: memref<32x32xf32, #tpu.memory_space<vmem>>, %arg4: memref<32x1xf32, #tpu.memory_space<vmem>>, %arg5: memref<1x32x256xf32, #tpu.memory_space<vmem>>) attributes {dimension_semantics = [#tpu.dimension_semantics<parallel>, #tpu.dimension_semantics<parallel>], iteration_bounds = array<i64: 2, 1>, scalar_prefetch = 0 : i64, scratch_operands = 0 : i64, tpu.core_type = #tpu.core_type<tc>, window_params = [{transform_indices = @transform_0, window_bounds = array<i64: 1, 32, 256>}, {pipeline_mode = #tpu.pipeline_mode<synchronous>, transform_indices = @transform_1, window_bounds = array<i64: 32, 32>}, {pipeline_mode = #tpu.pipeline_mode<synchronous>, transform_indices = @transform_2, window_bounds = array<i64: 32, 1>}, {transform_indices = @transform_3, window_bounds = array<i64: 1, 32, 256>}]} {
    %c0 = arith.constant 0 : index
    %c0_0 = arith.constant 0 : index
    %c0_1 = arith.constant 0 : index
    %0 = vector.load %arg2[%c0, %c0_0, %c0_1] : memref<1x32x256xf32, #tpu.memory_space<vmem>>, vector<1x32x256xf32>
    %1 = vector.shape_cast %0 : vector<1x32x256xf32> to vector<32x256xf32>
    %c0_2 = arith.constant 0 : index
    %c0_3 = arith.constant 0 : index
    %2 = vector.load %arg3[%c0_2, %c0_3] : memref<32x32xf32, #tpu.memory_space<vmem>>, vector<32x32xf32>
    %cst = arith.constant 2.500000e-01 : f32
    %3 = vector.broadcast %cst : f32 to vector<32x32xf32>
    %4 = arith.mulf %2, %3 : vector<32x32xf32>
    %cst_4 = arith.constant dense<0.000000e+00> : vector<32x256xf32>
    %5 = tpu.matmul %4, %1, %cst_4 {dimension_numbers = #tpu.dot_dimension_numbers<[1], [0], [0], [1], [0, 0, 1, 1], [], []>} : vector<32x32xf32>, vector<32x256xf32>, vector<32x256xf32> -> vector<32x256xf32>
    %c0_5 = arith.constant 0 : index
    %c0_6 = arith.constant 0 : index
    %6 = vector.load %arg4[%c0_5, %c0_6] : memref<32x1xf32, #tpu.memory_space<vmem>>, vector<32x1xf32>
    %7 = vector.broadcast %6 : vector<32x1xf32> to vector<32x256xf32>
    %8 = arith.addf %5, %7 : vector<32x256xf32>
    %cst_7 = arith.constant 0.000000e+00 : f32
    %9 = vector.broadcast %cst_7 : f32 to vector<32x256xf32>
    %10 = arith.cmpf oge, %8, %9 : vector<32x256xf32>
    %cst_8 = arith.constant 2.000000e-01 : f32
    %11 = vector.broadcast %cst_8 : f32 to vector<32x256xf32>
    %12 = arith.mulf %11, %8 : vector<32x256xf32>
    %13 = arith.select %10, %8, %12 : vector<32x256xi1>, vector<32x256xf32>
    %14 = arith.mulf %13, %13 : vector<32x256xf32>
    %cst_9 = arith.constant dense<0.000000e+00> : vector<256xf32>
    %15 = vector.multi_reduction <add>, %14, %cst_9 [0] : vector<32x256xf32> to vector<256xf32>
    %16 = vector.shape_cast %15 : vector<256xf32> to vector<1x256xf32>
    %cst_10 = arith.constant 3.200000e+01 : f32
    %17 = vector.broadcast %cst_10 : f32 to vector<1x256xf32>
    %18 = arith.divf %16, %17 : vector<1x256xf32>
    %cst_11 = arith.constant 9.99999993E-9 : f32
    %19 = vector.broadcast %cst_11 : f32 to vector<1x256xf32>
    %20 = arith.addf %18, %19 : vector<1x256xf32>
    %21 = math.rsqrt %20 : vector<1x256xf32>
    %22 = vector.broadcast %21 : vector<1x256xf32> to vector<32x256xf32>
    %23 = arith.mulf %13, %22 : vector<32x256xf32>
    %c0_12 = arith.constant 0 : index
    %c0_13 = arith.constant 0 : index
    %c0_14 = arith.constant 0 : index
    %24 = vector.load %arg5[%c0_12, %c0_13, %c0_14] : memref<1x32x256xf32, #tpu.memory_space<vmem>>, vector<1x32x256xf32>
    %25 = vector.shape_cast %24 : vector<1x32x256xf32> to vector<32x256xf32>
    %26 = vector.shape_cast %23 : vector<32x256xf32> to vector<1x32x256xf32>
    tpu.vector_store %arg5[%c0_12, %c0_13, %c0_14], %26 {strides = array<i32>} : memref<1x32x256xf32, #tpu.memory_space<vmem>>, vector<1x32x256xf32>,
    return
  }
  func.func @transform_0(%arg0: i32, %arg1: i32) -> (i32, i32, i32) {
    %c0_i32 = arith.constant 0 : i32
    %c0_i32_0 = arith.constant 0 : i32
    return %arg0, %c0_i32, %arg1 : i32, i32, i32
  }
  func.func @transform_1(%arg0: i32, %arg1: i32) -> (i32, i32) {
    %c0_i32 = arith.constant 0 : i32
    %c0_i32_0 = arith.constant 0 : i32
    %c0_i32_1 = arith.constant 0 : i32
    return %c0_i32, %c0_i32_0 : i32, i32
  }
  func.func @transform_2(%arg0: i32, %arg1: i32) -> (i32, i32) {
    %c0_i32 = arith.constant 0 : i32
    %c0_i32_0 = arith.constant 0 : i32
    %c0_i32_1 = arith.constant 0 : i32
    return %c0_i32, %c0_i32_0 : i32, i32
  }
  func.func @transform_3(%arg0: i32, %arg1: i32) -> (i32, i32, i32) {
    %c0_i32 = arith.constant 0 : i32
    %c0_i32_0 = arith.constant 0 : i32
    return %arg0, %c0_i32, %arg1 : i32, i32, i32
  }
}

</mosaic_0001>

<llo_original>
// kernel: factor_projection_3d2d.1
$region0: #{factor_projection_3d2d.1}
  #allocation0 [shape = 'u32[]', space=smem, size = 0x4, offset = 0x4, fixed_abs, tag = 'smem constant byte address 0x4 - core index']
  #allocation1 [shape = 'u32[144,128]{1,0:T(1,128)}', space=vmem, size = 0x12000, scoped, tag = 'internal scratch']
  %s0 = inlined_call_operand.vmem [shape: f32[2,32,256], index: 0, kind: input, shape index: {}]
  %s1 = inlined_call_operand.vmem [shape: f32[32,32], index: 1, kind: input, shape index: {}]
  %s2 = inlined_call_operand.vmem [shape: f32[32,1], index: 2, kind: input, shape index: {}]
  %s3 = inlined_call_operand.vmem [shape: f32[2,32,256], index: 3, kind: output, shape index: {}]
  %s4 = sld [smem:[#allocation0]]
  $region45: #{factor_projection_3d2d.1} parent=0
    _
  %s6 = ssub.s32 1, %s4
  %s7 = scalar_select 0, %s6, %s4
  loop: start=0, step=1, limit=4
  $region2: #{factor_projection_3d2d.1} parent=0 // loop_pre_header
    _
  $region3: #{factor_projection_3d2d.1} parent=0 // loop_header
    %s9 = sphi 0, %s13
    %p10 = scmp.ge.s32.totalorder %s9, 4
    %s16 = sphi 0, %s28
    %s17 = sphi 0, %s24
    %s18 = sphi 0, %s16
    %s19 = sphi 0, %s17
    %s20 = sphi 0, %s18
    %s21 = sphi 0, %s19
    %s33 = sphi 0, %s35
    %s36 = sphi 0, %s33
    %s37 = sphi 0, %s36
    %s53 = sphi 0, %s37
    %s57 = sphi 0, %s57
    %s59 = sphi 0, %s57
    %s60 = sphi 0, %s59
    %s74 = sphi 0, %s60
    %s78 = sphi 0, %s78
    %s80 = sphi 0, %s78
    %s81 = sphi 0, %s80
    %s95 = sphi 0, %s81
    %s103 = sphi 0, %s105
    %s106 = sphi 0, %s103
    %s107 = sphi 0, %s106
    %s123 = sphi 0, %s107
  $region4: #{factor_projection_3d2d.1} parent=0 // loop_header_branch
    %12 = sbr.rel (%p10) target = $region8
  $region5: #{factor_projection_3d2d.1} parent=0 // loop_body
    %s14 = ssub.s32 %s9, 1
    %s15 = ssub.s32 %s9, 2
    %s22 = sadd.s32 1, %s17
    %p23 = scmp.ge.s32.totalorder %s22, 1
    %s24 = scalar_select %p23, 0, %s22
    %s25 = sadd.s32 1, %s16
    %s26 = scalar_select %p23, %s25, %s16
    %p27 = scmp.ge.s32.totalorder %s26, 2
    %s28 = scalar_select %p27, 0, %s26
    %s29 = ssub.s32 %s16, %s28
    %s30 = ssub.s32 %s17, %s24
    %s31 = sor.u32 %s29, %s30
    %p32 = scmp.eq.s32.totalorder %s31, 0
    %s34 = sadd.s32 %s33, 1
    %s35 = scalar_select %p32, %s33, %s34
    %p38 = pneg %p32
    %p39 = scmp.eq.s32.totalorder %s9, 1
    %p40 = por %p38, %p39
    %p41 = scmp.ne.s32.totalorder %s33, %s36
    %p42 = scmp.eq.s32.totalorder %s9, 0
    %p43 = por %p41, %p42
    %p44 = scmp.ne.s32.totalorder %s33, %s36
    %p45 = scmp.eq.s32.totalorder %s14, 1
    %p46 = por %p44, %p45
    %p47 = scmp.ne.s32.totalorder %s36, %s37
    %p48 = scmp.eq.s32.totalorder %s14, 0
    %p49 = por %p47, %p48
    %p50 = scmp.ne.s32.totalorder %s36, %s37
    %p51 = scmp.eq.s32.totalorder %s15, 1
    %p52 = por %p50, %p51
    %p54 = scmp.ne.s32.totalorder %s37, %s53
    %p55 = scmp.eq.s32.totalorder %s15, 0
    %p56 = por %p54, %p55
    %s58 = sadd.s32 %s57, 1
    %p61 = scmp.eq.s32.totalorder %s9, 1
    %p62 = scmp.ne.s32.totalorder %s57, %s59
    %p63 = scmp.eq.s32.totalorder %s9, 0
    %p64 = por %p62, %p63
    %p65 = scmp.ne.s32.totalorder %s57, %s59
    %p66 = scmp.eq.s32.totalorder %s14, 1
    %p67 = por %p65, %p66
    %p68 = scmp.ne.s32.totalorder %s59, %s60
    %p69 = scmp.eq.s32.totalorder %s14, 0
    %p70 = por %p68, %p69
    %p71 = scmp.ne.s32.totalorder %s59, %s60
    %p72 = scmp.eq.s32.totalorder %s15, 1
    %p73 = por %p71, %p72
    %p75 = scmp.ne.s32.totalorder %s60, %s74
    %p76 = scmp.eq.s32.totalorder %s15, 0
    %p77 = por %p75, %p76
    %s79 = sadd.s32 %s78, 1
    %p82 = scmp.eq.s32.totalorder %s9, 1
    %p83 = scmp.ne.s32.totalorder %s78, %s80
    %p84 = scmp.eq.s32.totalorder %s9, 0
    %p85 = por %p83, %p84
    %p86 = scmp.ne.s32.totalorder %s78, %s80
    %p87 = scmp.eq.s32.totalorder %s14, 1
    %p88 = por %p86, %p87
    %p89 = scmp.ne.s32.totalorder %s80, %s81
    %p90 = scmp.eq.s32.totalorder %s14, 0
    %p91 = por %p89, %p90
    %p92 = scmp.ne.s32.totalorder %s80, %s81
    %p93 = scmp.eq.s32.totalorder %s15, 1
    %p94 = por %p92, %p93
    %p96 = scmp.ne.s32.totalorder %s81, %s95
    %p97 = scmp.eq.s32.totalorder %s15, 0
    %p98 = por %p96, %p97
    %s99 = ssub.s32 %s16, %s28
    %s100 = ssub.s32 %s17, %s24
    %s101 = sor.u32 %s99, %s100
    %p102 = scmp.eq.s32.totalorder %s101, 0
    %s104 = sadd.s32 %s103, 1
    %s105 = scalar_select %p102, %s103, %s104
    %p108 = pneg %p102
    %p109 = scmp.eq.s32.totalorder %s9, 1
    %p110 = por %p108, %p109
    %p111 = scmp.ne.s32.totalorder %s103, %s106
    %p112 = scmp.eq.s32.totalorder %s9, 0
    %p113 = por %p111, %p112
    %p114 = scmp.ne.s32.totalorder %s103, %s106
    %p115 = scmp.eq.s32.totalorder %s14, 1
    %p116 = por %p114, %p115
    %p117 = scmp.ne.s32.totalorder %s106, %s107
    %p118 = scmp.eq.s32.totalorder %s14, 0
    %p119 = por %p117, %p118
    %p120 = scmp.ne.s32.totalorder %s106, %s107
    %p121 = scmp.eq.s32.totalorder %s15, 1
    %p122 = por %p120, %p121
    %p124 = scmp.ne.s32.totalorder %s107, %s123
    %p125 = scmp.eq.s32.totalorder %s15, 0
    %p126 = por %p124, %p125
    %p127 = scmp.le.s32.totalorder 1, %s9
    %p128 = scmp.lt.s32.totalorder %s9, 3
    %p129 = pnand %p127, %p128
    %p130 = pneg %p129
    // Predicated region
    $region9: #{factor_projection_3d2d.1} parent=5 // pred_check
      _
    $region10: #{factor_projection_3d2d.1} parent=5 // pred_check_branch
      %132 = sbr.rel (%p129) target = $region12
    $region11: #{factor_projection_3d2d.1} parent=5 // pred_region
      %s133 = ssub.s32 %s9, 1
      // Predicated region
      $region13: #{factor_projection_3d2d.1} parent=11 // pred_check
        %p134 = pneg %p70
      $region14: #{factor_projection_3d2d.1} parent=11 // pred_check_branch
        %136 = sbr.rel (%p134) target = $region16
      $region15: #{factor_projection_3d2d.1} parent=11 // pred_region
        _
      $region16: #{factor_projection_3d2d.1} parent=11 // pred_fallthru
        _
      // Predicated region
      $region17: #{factor_projection_3d2d.1} parent=11 // pred_check
        %p137 = pneg %p91
      $region18: #{factor_projection_3d2d.1} parent=11 // pred_check_branch
        %139 = sbr.rel (%p137) target = $region20
      $region19: #{factor_projection_3d2d.1} parent=11 // pred_region
        _
      $region20: #{factor_projection_3d2d.1} parent=11 // pred_fallthru
        _
    $region12: #{factor_projection_3d2d.1} parent=5 // pred_fallthru
      _
    %p140 = scmp.lt.s32.totalorder %s9, 2
    // Predicated region
    $region21: #{factor_projection_3d2d.1} parent=5 // pred_check
      %p141 = pneg %p140
    $region22: #{factor_projection_3d2d.1} parent=5 // pred_check_branch
      %143 = sbr.rel (%p141) target = $region24
    $region23: #{factor_projection_3d2d.1} parent=5 // pred_region
      // Predicated region
      $region25: #{factor_projection_3d2d.1} parent=23 // pred_check
        %p144 = pneg %p43
      $region26: #{factor_projection_3d2d.1} parent=23 // pred_check_branch
        %146 = sbr.rel (%p144) target = $region28
      $region27: #{factor_projection_3d2d.1} parent=23 // pred_region
        %s147 = smul.u32 2, %s17
        %p148 = scmp.lt.s32.totalorder %s16, 1
        %s149 = scalar_select %p148, %s16, 1
        %p150 = scmp.lt.s32.totalorder %s147, 1
        %s151 = scalar_select %p150, %s147, 1
        %s152 = smul.addr %s149, 8
        %s153 = sadd.s32 %s151, %s152
        %s154 = smul.addr %s153, 8
        %s155 = scalar_lea.vmem %s0, %s154
        %s156 = smul.u32 2, %s17
      $region28: #{factor_projection_3d2d.1} parent=23 // pred_fallthru
        _
    $region24: #{factor_projection_3d2d.1} parent=5 // pred_fallthru
      _
    %p157 = scmp.le.s32.totalorder 1, %s9
    %p158 = scmp.lt.s32.totalorder %s9, 3
    %p159 = pnand %p157, %p158
    %p160 = pneg %p159
    // Predicated region
    $region29: #{factor_projection_3d2d.1} parent=5 // pred_check
      _
    $region30: #{factor_projection_3d2d.1} parent=5 // pred_check_branch
      %162 = sbr.rel (%p159) target = $region32
    $region31: #{factor_projection_3d2d.1} parent=5 // pred_region
      %s163 = ssub.s32 %s9, 1
      %s164 = smul.u32 2, %s19
      %p165 = scmp.lt.s32.totalorder %s18, 1
      %s166 = scalar_select %p165, %s18, 1
      %p167 = scmp.lt.s32.totalorder %s164, 1
      %s168 = scalar_select %p167, %s164, 1
      %s169 = smul.addr %s166, 8
      %s170 = sadd.s32 %s168, %s169
      %s171 = smul.addr %s170, 8
      %s172 = scalar_lea.vmem %s0, %s171
      %p173 = pneg %p49
      %p174 = pneg %p46
      %p175 = pneg %p70
      %p176 = pneg %p67
      %p177 = pneg %p91
      %p178 = pneg %p88
      %p179 = pneg %p119
      %p180 = pneg %p116
      %s181 = smul.u32 2, %s19
      %p182 = scmp.lt.s32.totalorder %s18, 1
      %s183 = scalar_select %p182, %s18, 1
      %p184 = scmp.lt.s32.totalorder %s181, 1
      %s185 = scalar_select %p184, %s181, 1
      %s186 = smul.addr %s183, 8
      %s187 = sadd.s32 %s185, %s186
      %s188 = smul.addr %s187, 8
      %s189 = scalar_lea.vmem %s3, %s188
      %s190 = smul.u32 2, %s19
      %p191 = scmp.lt.s32.totalorder %s18, 1
      %s192 = scalar_select %p191, %s18, 1
      %p193 = scmp.lt.s32.totalorder %s190, 1
      %s194 = scalar_select %p193, %s190, 1
      %s195 = smul.addr %s192, 8
      %s196 = sadd.s32 %s194, %s195
      %s197 = smul.addr %s196, 8
      %s198 = scalar_lea.vmem %s0, %s197
      %s199 = smul.u32 2, %s19
      %s200 = smul.u32 2, %s19
      %p201 = scmp.lt.s32.totalorder %s18, 1
      %s202 = scalar_select %p201, %s18, 1
      %p203 = scmp.lt.s32.totalorder %s200, 1
      %s204 = scalar_select %p203, %s200, 1
      %s205 = smul.addr %s202, 8
      %s206 = sadd.s32 %s204, %s205
      %s207 = smul.addr %s206, 8
      %s208 = scalar_lea.vmem %s3, %s207
      %s209 = smul.u32 2, %s19
      %v210 = vld [vmem:[%s198] sm:$0xff]
      %v211 = vld [vmem:[%s198 + $0x8] sm:$0xff]
      %v212 = vld [vmem:[%s198 + $0x10] sm:$0xff]
      %v213 = vld [vmem:[%s198 + $0x18] sm:$0xff]
      %v214 = vld [vmem:[%s198 + $0x20] sm:$0xff]
      %v215 = vld [vmem:[%s198 + $0x28] sm:$0xff]
      %v216 = vld [vmem:[%s198 + $0x30] sm:$0xff]
      %v217 = vld [vmem:[%s198 + $0x38] sm:$0xff]
      %v218 = vld [vmem:[%s1] sm:$0xff]
      %v219 = vld [vmem:[%s1 + $0x8] sm:$0xff]
      %v220 = vld [vmem:[%s1 + $0x10] sm:$0xff]
      %v221 = vld [vmem:[%s1 + $0x18] sm:$0xff]
      %v222 = vmul.f32 %v218, 0.25
      %v223 = vmul.f32 %v219, 0.25
      %v224 = vmul.f32 %v220, 0.25
      %v225 = vmul.f32 %v221, 0.25
      %v226 = vld [vmem:[%s2] sm:$0xff]
      %v227 = vld [vmem:[%s2 + $0x8] sm:$0xff]
      %v228 = vld [vmem:[%s2 + $0x10] sm:$0xff]
      %v229 = vld [vmem:[%s2 + $0x18] sm:$0xff]
      %231 = vset.pattern.permute.xlu0 0
      %232 = vperm.xlu0 %231, %v226
      %v233 = vpop.permute.xlu0 %232
      %236 = vset.pattern.permute.xlu0 0
      %237 = vperm.xlu0 %236, %v227
      %v238 = vpop.permute.xlu0 %237
      %241 = vset.pattern.permute.xlu0 0
      %242 = vperm.xlu0 %241, %v228
      %v243 = vpop.permute.xlu0 %242
      %246 = vset.pattern.permute.xlu0 0
      %247 = vperm.xlu0 %246, %v229
      %v248 = vpop.permute.xlu0 %247
      %vm250 = vcmask 261120
      %v252 = vsel %vm250, %v222, 0
      %v255 = vsel %vm250, %v223, 0
      %v258 = vsel %vm250, %v224, 0
      %v261 = vsel %vm250, %v225, 0
      %263 = vmatprep.subr.mxu0 0.0
      %264 = vmatpush1.msra.mxu0 0.0
      %265 = vmatprep.subr.mxu0 0.0
      %266 = vmatpush1.msra.mxu0 0.0
      %267 = vmatprep.subr.mxu0 0.0
      %268 = vmatpush1.msra.mxu0 0.0
      %269 = vmatprep.subr.mxu0 0.0
      %270 = vmatpush1.msra.mxu0 0.0
      %271 = vmatprep.subr.mxu0 0.0
      %272 = vmatpush1.msra.mxu0 0.0
      %273 = vmatprep.subr.mxu0 0.0
      %274 = vmatpush1.msra.mxu0 0.0
      %275 = vmatprep.subr.mxu0 0.0
      %276 = vmatpush1.msra.mxu0 0.0
      %277 = vmatprep.subr.mxu0 0.0
      %278 = vmatpush1.msra.mxu0 0.0
      %279 = vmatprep.subr.mxu0 0.0
      %280 = vmatpush1.msra.mxu0 0.0
      %281 = vmatprep.subr.mxu0 0.0
      %282 = vmatpush1.msra.mxu0 0.0
      %283 = vmatprep.subr.mxu0 0.0
      %284 = vmatpush1.msra.mxu0 0.0
      %285 = vmatprep.subr.mxu0 0.0
      %286 = vmatpush1.msra.mxu0 0.0
      %287 = vmatprep.subr.mxu0 %v217
      %288 = vmatpush1.msra.mxu0 %v216
      %289 = vmatprep.subr.mxu0 %v215
      %290 = vmatpush1.msra.mxu0 %v214
      %291 = vmatprep.subr.mxu0 %v213
      %292 = vmatpush1.msra.mxu0 %v212
      %293 = vmatprep.subr.mxu0 %v211
      %294 = vmatpush1.msra.mxu0 %v210
      %295 = vmatprep.subr.mxu0 0.0
      %296 = vmatpush2.msra.mxu0 0.0
      %297 = vmatprep.subr.mxu0 0.0
      %298 = vmatpush2.msra.mxu0 0.0
      %299 = vmatprep.subr.mxu0 0.0
      %300 = vmatpush2.msra.mxu0 0.0
      %301 = vmatprep.subr.mxu0 0.0
      %302 = vmatpush2.msra.mxu0 0.0
      %303 = vmatprep.subr.mxu0 0.0
      %304 = vmatpush2.msra.mxu0 0.0
      %305 = vmatprep.subr.mxu0 0.0
      %306 = vmatpush2.msra.mxu0 0.0
      %307 = vmatprep.subr.mxu0 0.0
      %308 = vmatpush2.msra.mxu0 0.0
      %309 = vmatprep.subr.mxu0 0.0
      %310 = vmatpush2.msra.mxu0 0.0
      %311 = vmatprep.subr.mxu0 0.0
      %312 = vmatpush2.msra.mxu0 0.0
      %313 = vmatprep.subr.mxu0 0.0
      %314 = vmatpush2.msra.mxu0 0.0
      %315 = vmatprep.subr.mxu0 0.0
      %316 = vmatpush2.msra.mxu0 0.0
      %317 = vmatprep.subr.mxu0 0.0
      %318 = vmatpush2.msra.mxu0 0.0
      %319 = vmatprep.subr.mxu0 0.0
      %320 = vmatpush2.msra.mxu0 0.0
      %321 = vmatprep.subr.mxu0 0.0
      %322 = vmatpush2.msra.mxu0 0.0
      %323 = vmatprep.subr.mxu0 0.0
      %324 = vmatpush2.msra.mxu0 0.0
      %325 = vmatprep.subr.mxu0 0.0
      %326 = vmatpush2.msra.mxu0 0.0
      %327 = vmatprep.mubr.f32.mxu0 0.0
      %328 = vmatmul.mubr.f32.gmra.mxu0 %v252
      %v329 = vpop.f32.mrf.mxu0
      %v330 = vadd.f32 %v233, %v329
      %v331 = vpop.f32.mrf.mxu0
      %v332 = vadd.f32 %v233, %v331
      %333 = vmatprep.mubr.f32.mxu0 0.0
      %334 = vmatmul.mubr.f32.gmra.mxu0 %v255
      %v335 = vpop.f32.mrf.mxu0
      %v336 = vadd.f32 %v238, %v335
      %v337 = vpop.f32.mrf.mxu0
      %v338 = vadd.f32 %v238, %v337
      %339 = vmatprep.mubr.f32.mxu0 0.0
      %340 = vmatmul.mubr.f32.gmra.mxu0 %v258
      %v341 = vpop.f32.mrf.mxu0
      %v342 = vadd.f32 %v243, %v341
      %v343 = vpop.f32.mrf.mxu0
      %v344 = vadd.f32 %v243, %v343
      %345 = vmatprep.mubr.f32.mxu0 0.0
      %346 = vmatmul.mubr.f32.gmra.mxu0 %v261
      %v347 = vpop.f32.mrf.mxu0
      %v348 = vadd.f32 %v248, %v347
      %v349 = vpop.f32.mrf.mxu0
      %v350 = vadd.f32 %v248, %v349
      %351 = vdwg.mxu0
      %vm352 = vcmp.ge.f32.partialorder %v330, 0.0
      %vm353 = vcmp.ge.f32.partialorder %v332, 0.0
      %vm354 = vcmp.ge.f32.partialorder %v336, 0.0
      %vm355 = vcmp.ge.f32.partialorder %v338, 0.0
      %vm356 = vcmp.ge.f32.partialorder %v342, 0.0
      %vm357 = vcmp.ge.f32.partialorder %v344, 0.0
      %vm358 = vcmp.ge.f32.partialorder %v348, 0.0
      %vm359 = vcmp.ge.f32.partialorder %v350, 0.0
      %v360 = vmul.f32 %v330, 0.2
      %v361 = vmul.f32 %v332, 0.2
      %v362 = vmul.f32 %v336, 0.2
      %v363 = vmul.f32 %v338, 0.2
      %v364 = vmul.f32 %v342, 0.2
      %v365 = vmul.f32 %v344, 0.2
      %v366 = vmul.f32 %v348, 0.2
      %v367 = vmul.f32 %v350, 0.2
      %v368 = vsel %vm352, %v330, %v360
      %v369 = vsel %vm353, %v332, %v361
      %v370 = vsel %vm354, %v336, %v362
      %v371 = vsel %vm355, %v338, %v363
      %v372 = vsel %vm356, %v342, %v364
      %v373 = vsel %vm357, %v344, %v365
      %v374 = vsel %vm358, %v348, %v366
      %v375 = vsel %vm359, %v350, %v367
      %v376 = vmul.f32 %v368, %v368
      %v377 = vmul.f32 %v369, %v369
      %v378 = vmul.f32 %v370, %v370
      %v379 = vmul.f32 %v371, %v371
      %v380 = vmul.f32 %v372, %v372
      %v381 = vmul.f32 %v373, %v373
      %v382 = vmul.f32 %v374, %v374
      %v383 = vmul.f32 %v375, %v375
      %v384 = vadd.f32 %v376, %v378
      %v385 = vadd.f32 %v384, %v380
      %v386 = vadd.f32 %v385, %v382
      %v387 = vrot.slane %v386, 4
      %v388 = vadd.f32 %v386, %v387
      %v389 = vrot.slane %v388, 2
      %v390 = vadd.f32 %v388, %v389
      %v391 = vrot.slane %v390, 1
      %v392 = vadd.f32 %v390, %v391
      %v393 = vadd.f32 %v377, %v379
      %v394 = vadd.f32 %v393, %v381
      %v395 = vadd.f32 %v394, %v383
      %v396 = vrot.slane %v395, 4
      %v397 = vadd.f32 %v395, %v396
      %v398 = vrot.slane %v397, 2
      %v399 = vadd.f32 %v397, %v398
      %v400 = vrot.slane %v399, 1
      %v401 = vadd.f32 %v399, %v400
      %v402 = vrcp.pop 32.0
      %v403 = vmul.f32 %v392, %v402
      %v404 = vmul.f32 %v401, %v402
      %v405 = vadd.f32 %v403, 1e-08
      %v406 = vadd.f32 %v404, 1e-08
      %v407 = vrsqrt.pop %v405
      %v408 = vrsqrt.pop %v406
      %v409 = vmul.f32 %v368, %v407
      %v410 = vmul.f32 %v369, %v408
      %v411 = vmul.f32 %v370, %v407
      %v412 = vmul.f32 %v371, %v408
      %v413 = vmul.f32 %v372, %v407
      %v414 = vmul.f32 %v373, %v408
      %v415 = vmul.f32 %v374, %v407
      %v416 = vmul.f32 %v375, %v408
      %417 = vst [vmem:[%s208] sm:$0xff] %v409
      %418 = vst [vmem:[%s208 + $0x8] sm:$0xff] %v410
      %419 = vst [vmem:[%s208 + $0x10] sm:$0xff] %v411
      %420 = vst [vmem:[%s208 + $0x18] sm:$0xff] %v412
      %421 = vst [vmem:[%s208 + $0x20] sm:$0xff] %v413
      %422 = vst [vmem:[%s208 + $0x28] sm:$0xff] %v414
      %423 = vst [vmem:[%s208 + $0x30] sm:$0xff] %v415
      %424 = vst [vmem:[%s208 + $0x38] sm:$0xff] %v416
      %s425 = smul.u32 2, %s19
      %p426 = scmp.lt.s32.totalorder %s18, 1
      %s427 = scalar_select %p426, %s18, 1
      %p428 = scmp.lt.s32.totalorder %s425, 1
      %s429 = scalar_select %p428, %s425, 1
      %s430 = smul.addr %s427, 8
      %s431 = sadd.s32 %s429, %s430
      %s432 = smul.addr %s431, 8
      %s433 = scalar_lea.vmem %s3, %s432
      // Predicated region
      $region33: #{factor_projection_3d2d.1} parent=31 // pred_check
        %p434 = pneg %p116
      $region34: #{factor_projection_3d2d.1} parent=31 // pred_check_branch
        %436 = sbr.rel (%p434) target = $region36
      $region35: #{factor_projection_3d2d.1} parent=31 // pred_region
        %s437 = smul.u32 2, %s19
      $region36: #{factor_projection_3d2d.1} parent=31 // pred_fallthru
        _
    $region32: #{factor_projection_3d2d.1} parent=5 // pred_fallthru
      _
    %p438 = scmp.le.s32.totalorder 2, %s9
    // Predicated region
    $region37: #{factor_projection_3d2d.1} parent=5 // pred_check
      %p439 = pneg %p438
    $region38: #{factor_projection_3d2d.1} parent=5 // pred_check_branch
      %441 = sbr.rel (%p439) target = $region40
    $region39: #{factor_projection_3d2d.1} parent=5 // pred_region
      %s442 = ssub.s32 %s9, 2
      // Predicated region
      $region41: #{factor_projection_3d2d.1} parent=39 // pred_check
        %p443 = pneg %p122
      $region42: #{factor_projection_3d2d.1} parent=39 // pred_check_branch
        %445 = sbr.rel (%p443) target = $region44
      $region43: #{factor_projection_3d2d.1} parent=39 // pred_region
        %s446 = smul.u32 2, %s21
        %p447 = scmp.lt.s32.totalorder %s20, 1
        %s448 = scalar_select %p447, %s20, 1
        %p449 = scmp.lt.s32.totalorder %s446, 1
        %s450 = scalar_select %p449, %s446, 1
        %s451 = smul.addr %s448, 8
        %s452 = sadd.s32 %s450, %s451
        %s453 = smul.addr %s452, 8
        %s454 = scalar_lea.vmem %s3, %s453
      $region44: #{factor_projection_3d2d.1} parent=39 // pred_fallthru
        _
    $region40: #{factor_projection_3d2d.1} parent=5 // pred_fallthru
      _
  $region6: #{factor_projection_3d2d.1} parent=0 // loop_footer
    %s13 = sadd.s32 1, %s9
  $region7: #{factor_projection_3d2d.1} parent=0 // loop_footer_branch
    %8 = sbr.rel target = $region3
  $region8: #{factor_projection_3d2d.1} parent=0 // loop_exit
    _

</llo_original>
